<compile_context>
chip_gen: v7x
topology: tpu7x:2x2x1
jax: 0.10.0
libtpu: 0.0.40
codegen_flags: <defaults>
</compile_context>

<pallas_src>
import functools

import jax
import jax.numpy as jnp
from jax.experimental import pallas as pl
from jax.experimental.pallas import tpu as pltpu


def _tolerance_kernel(x_ref, w1_ref, b1_ref, w2_ref, b2_ref, w3_ref, b3_ref,
                      o_ref):
    """One token tile through the full 3-layer 1x1-conv head.

    x_ref : (C_in, T)   bf16 token features (channels-major, tokens on lanes)
    w1    : (C_h, C_in) bf16 conv1 weight with bn1 scale folded in
    b1    : (C_h, 1)    f32  folded conv1-bias + bn1 shift
    w2    : (C_h, C_h)  bf16 conv2 weight with bn2 scale folded in
    b2    : (C_h, 1)    f32  folded conv2-bias + bn2 shift
    w3    : (A, C_h)    bf16 conv3 weight
    b3    : (A, 1)      f32  conv3 bias
    o_ref : (A, T)      f32  output tile (lane-dense along tokens)
    """
    x = x_ref[...]

    h = jnp.dot(w1_ref[...], x, preferred_element_type=jnp.float32)
    h = jnp.maximum(h + b1_ref[...], 0.0).astype(jnp.bfloat16)

    h = jnp.dot(w2_ref[...], h, preferred_element_type=jnp.float32)
    h = jnp.maximum(h + b2_ref[...], 0.0).astype(jnp.bfloat16)

    y = jnp.dot(w3_ref[...], h, preferred_element_type=jnp.float32) + b3_ref[...]
    o_ref[...] = y.astype(o_ref.dtype)


def _run_mlp(x, w1, b1, w2, b2, w3, b3, *, tile_t):
    """x: (B, C_in, N) bf16, N % tile_t == 0  ->  (B, A, N) f32."""
    B, C_in, N = x.shape
    C_h = w1.shape[0]
    A = w3.shape[0]
    assert N % tile_t == 0

    full = lambda shape: pl.BlockSpec(shape, lambda b, t: (0, 0))

    return pl.pallas_call(
        _tolerance_kernel,
        out_shape=jax.ShapeDtypeStruct((B, A, N), jnp.float32),
        grid=(B, N // tile_t),
        in_specs=[
            pl.BlockSpec((None, C_in, tile_t), lambda b, t: (b, 0, t)),  # x slab
            full((C_h, C_in)),   # w1 (bn1-scale folded)
            full((C_h, 1)),      # b1 shift
            full((C_h, C_h)),    # w2 (bn2-scale folded)
            full((C_h, 1)),      # b2 shift
            full((A, C_h)),      # w3
            full((A, 1)),        # b3
        ],
        out_specs=pl.BlockSpec((None, A, tile_t), lambda b, t: (b, 0, t)),
        compiler_params=pltpu.CompilerParams(
            dimension_semantics=("parallel", "parallel")),
    )(x, w1, b1, w2, b2, w3, b3)


class ToleranceNetPallas:
    """JAX/Pallas port of ToleranceNet (inference-mode BatchNorm, folded)."""

    def __init__(self, num_angle, num_depth, key):
        self.num_angle = num_angle
        self.num_depth = num_depth
        C_in, C_h = 256, 128
        eps = 1e-5

        ks = jax.random.split(key, 12)

        def u(k, shape, scale):
            return jax.random.uniform(k, shape, jnp.float32, -scale, scale)

        # Conv1d(k=1) weights in PyTorch (out, in, 1) layout -> stored (out, in).
        w1 = u(ks[0], (C_h, C_in), (1.0 / C_in) ** 0.5)
        cb1 = u(ks[1], (C_h,), (1.0 / C_in) ** 0.5)
        w2 = u(ks[2], (C_h, C_h), (1.0 / C_h) ** 0.5)
        cb2 = u(ks[3], (C_h,), (1.0 / C_h) ** 0.5)
        w3 = u(ks[4], (num_angle, C_h), (1.0 / C_h) ** 0.5)
        b3 = u(ks[5], (num_angle,), (1.0 / C_h) ** 0.5)

        # BatchNorm1d params + running stats (inference mode).
        g1 = 1.0 + 0.1 * jax.random.normal(ks[6], (C_h,), jnp.float32)
        be1 = 0.1 * jax.random.normal(ks[7], (C_h,), jnp.float32)
        rm1 = 0.1 * jax.random.normal(ks[8], (C_h,), jnp.float32)
        rv1 = jnp.abs(1.0 + 0.1 * jax.random.normal(ks[9], (C_h,), jnp.float32))
        g2 = 1.0 + 0.1 * jax.random.normal(ks[10], (C_h,), jnp.float32)
        be2 = 0.1 * jax.random.normal(ks[11], (C_h,), jnp.float32)
        rm2 = jnp.zeros((C_h,), jnp.float32)
        rv2 = jnp.ones((C_h,), jnp.float32)

        # Fold conv bias + BN into the weight (scale) and a per-channel shift:
        #   bn(conv(x)) = s * (W @ x + cb - rm) + beta = (s*W) @ x + (cb-rm)*s + beta
        s1 = g1 / jnp.sqrt(rv1 + eps)
        s2 = g2 / jnp.sqrt(rv2 + eps)
        w1f = w1 * s1[:, None]
        w2f = w2 * s2[:, None]
        sh1 = (cb1 - rm1) * s1 + be1
        sh2 = (cb2 - rm2) * s2 + be2

        # MXU operands in bf16; shifts / bias stay f32 (f32 epilogue on the acc).
        self.w1 = w1f.astype(jnp.bfloat16)
        self.b1 = sh1.reshape(C_h, 1)
        self.w2 = w2f.astype(jnp.bfloat16)
        self.b2 = sh2.reshape(C_h, 1)
        self.w3 = w3.astype(jnp.bfloat16)
        self.b3 = b3.reshape(num_angle, 1)

    @functools.partial(jax.jit, static_argnums=0)
    def _apply(self, vp_features):
        B, C, S, D = vp_features.shape
        N = S * D
        # Native layout: (B, C, S, D) -> (B, C, N). Free reshape, no transpose.
        x = vp_features.reshape(B, C, N).astype(jnp.bfloat16)

        # Token tile: big enough to amortize grid overhead, shrunk for tiny N.
        n128 = ((N + 127) // 128) * 128
        tile_t = min(512, n128)
        n_pad = ((N + tile_t - 1) // tile_t) * tile_t
        if n_pad != N:
            x = jnp.pad(x, ((0, 0), (0, 0), (0, n_pad - N)))

        y = _run_mlp(x, self.w1, self.b1, self.w2, self.b2, self.w3, self.b3,
                     tile_t=tile_t)
        # (B, A, N_pad) -> (B, A, S, D): slice padding, free reshape.
        return y[:, :, :N].reshape(B, self.num_angle, S, D)

    def __call__(self, vp_features, end_points):
        end_points['grasp_tolerance_pred'] = self._apply(vp_features)
        return end_points


def _reference(vp_features, net):
    """Pure-JAX reference mirroring the same bf16-MXU / f32-epilogue math."""
    B, C, S, D = vp_features.shape
    x = vp_features.reshape(B, C, S * D).astype(jnp.bfloat16)
    h = jnp.einsum('oc,bct->bot', net.w1, x,
                   preferred_element_type=jnp.float32)
    h = jnp.maximum(h + net.b1[None], 0.0).astype(jnp.bfloat16)
    h = jnp.einsum('oc,bct->bot', net.w2, h,
                   preferred_element_type=jnp.float32)
    h = jnp.maximum(h + net.b2[None], 0.0).astype(jnp.bfloat16)
    y = jnp.einsum('oc,bct->bot', net.w3, h,
                   preferred_element_type=jnp.float32) + net.b3[None]
    return y.reshape(B, net.num_angle, S, D)


if __name__ == "__main__":
    key = jax.random.PRNGKey(0)
    k_param, k_in = jax.random.split(key)

    num_angle, num_depth = 12, 4
    B, C, num_seed = 2, 256, 32            # B*S*D = 256 tokens (small test)
    net = ToleranceNetPallas(num_angle, num_depth, k_param)

    vp_features = jax.random.normal(k_in, (B, C, num_seed, num_depth),
                                    jnp.float32)

    end_points = net(vp_features, {})
    pred = jax.block_until_ready(end_points['grasp_tolerance_pred'])
    assert pred.shape == (B, num_angle, num_seed, num_depth), pred.shape

    ref = _reference(vp_features, net)
    assert jnp.allclose(pred, ref, atol=1e-2, rtol=1e-2), \
        float(jnp.max(jnp.abs(pred - ref)))

    print("KERNEL_OK")
</pallas_src>

<mosaic_0001>
module attributes {stable_mosaic.version = 11 : i64} {
  func.func @_tolerance_kernel(%arg0: i32, %arg1: i32, %arg2: memref<1x256x128xbf16, #tpu.memory_space<vmem>>, %arg3: memref<128x256xbf16, #tpu.memory_space<vmem>>, %arg4: memref<128x1xf32, #tpu.memory_space<vmem>>, %arg5: memref<128x128xbf16, #tpu.memory_space<vmem>>, %arg6: memref<128x1xf32, #tpu.memory_space<vmem>>, %arg7: memref<12x128xbf16, #tpu.memory_space<vmem>>, %arg8: memref<12x1xf32, #tpu.memory_space<vmem>>, %arg9: memref<1x12x128xf32, #tpu.memory_space<vmem>>) attributes {dimension_semantics = [#tpu.dimension_semantics<parallel>, #tpu.dimension_semantics<parallel>], iteration_bounds = array<i64: 2, 1>, scalar_prefetch = 0 : i64, scratch_operands = 0 : i64, tpu.core_type = #tpu.core_type<tc>, window_params = [{transform_indices = @transform_0, window_bounds = array<i64: 1, 256, 128>}, {pipeline_mode = #tpu.pipeline_mode<synchronous>, transform_indices = @transform_1, window_bounds = array<i64: 128, 256>}, {pipeline_mode = #tpu.pipeline_mode<synchronous>, transform_indices = @transform_2, window_bounds = array<i64: 128, 1>}, {pipeline_mode = #tpu.pipeline_mode<synchronous>, transform_indices = @transform_3, window_bounds = array<i64: 128, 128>}, {pipeline_mode = #tpu.pipeline_mode<synchronous>, transform_indices = @transform_4, window_bounds = array<i64: 128, 1>}, {pipeline_mode = #tpu.pipeline_mode<synchronous>, transform_indices = @transform_5, window_bounds = array<i64: 12, 128>}, {pipeline_mode = #tpu.pipeline_mode<synchronous>, transform_indices = @transform_6, window_bounds = array<i64: 12, 1>}, {transform_indices = @transform_7, window_bounds = array<i64: 1, 12, 128>}]} {
    %c0 = arith.constant 0 : index
    %c0_0 = arith.constant 0 : index
    %c0_1 = arith.constant 0 : index
    %0 = vector.load %arg2[%c0, %c0_0, %c0_1] : memref<1x256x128xbf16, #tpu.memory_space<vmem>>, vector<1x256x128xbf16>
    %1 = vector.shape_cast %0 : vector<1x256x128xbf16> to vector<256x128xbf16>
    %c0_2 = arith.constant 0 : index
    %c0_3 = arith.constant 0 : index
    %2 = vector.load %arg3[%c0_2, %c0_3] : memref<128x256xbf16, #tpu.memory_space<vmem>>, vector<128x256xbf16>
    %cst = arith.constant dense<0.000000e+00> : vector<128x128xf32>
    %3 = tpu.matmul %2, %1, %cst {dimension_numbers = #tpu.dot_dimension_numbers<[1], [0], [0], [1], [0, 0, 1, 1], [], []>} : vector<128x256xbf16>, vector<256x128xbf16>, vector<128x128xf32> -> vector<128x128xf32>
    %c0_4 = arith.constant 0 : index
    %c0_5 = arith.constant 0 : index
    %4 = vector.load %arg4[%c0_4, %c0_5] : memref<128x1xf32, #tpu.memory_space<vmem>>, vector<128x1xf32>
    %5 = vector.broadcast %4 : vector<128x1xf32> to vector<128x128xf32>
    %6 = arith.addf %3, %5 : vector<128x128xf32>
    %cst_6 = arith.constant 0.000000e+00 : f32
    %7 = vector.broadcast %cst_6 : f32 to vector<128x128xf32>
    %8 = arith.maximumf %6, %7 : vector<128x128xf32>
    %9 = arith.truncf %8 : vector<128x128xf32> to vector<128x128xbf16>
    %c0_7 = arith.constant 0 : index
    %c0_8 = arith.constant 0 : index
    %10 = vector.load %arg5[%c0_7, %c0_8] : memref<128x128xbf16, #tpu.memory_space<vmem>>, vector<128x128xbf16>
    %cst_9 = arith.constant dense<0.000000e+00> : vector<128x128xf32>
    %11 = tpu.matmul %10, %9, %cst_9 {dimension_numbers = #tpu.dot_dimension_numbers<[1], [0], [0], [1], [0, 0, 1, 1], [], []>} : vector<128x128xbf16>, vector<128x128xbf16>, vector<128x128xf32> -> vector<128x128xf32>
    %c0_10 = arith.constant 0 : index
    %c0_11 = arith.constant 0 : index
    %12 = vector.load %arg6[%c0_10, %c0_11] : memref<128x1xf32, #tpu.memory_space<vmem>>, vector<128x1xf32>
    %13 = vector.broadcast %12 : vector<128x1xf32> to vector<128x128xf32>
    %14 = arith.addf %11, %13 : vector<128x128xf32>
    %cst_12 = arith.constant 0.000000e+00 : f32
    %15 = vector.broadcast %cst_12 : f32 to vector<128x128xf32>
    %16 = arith.maximumf %14, %15 : vector<128x128xf32>
    %17 = arith.truncf %16 : vector<128x128xf32> to vector<128x128xbf16>
    %c0_13 = arith.constant 0 : index
    %c0_14 = arith.constant 0 : index
    %18 = vector.load %arg7[%c0_13, %c0_14] : memref<12x128xbf16, #tpu.memory_space<vmem>>, vector<12x128xbf16>
    %cst_15 = arith.constant dense<0.000000e+00> : vector<12x128xf32>
    %19 = tpu.matmul %18, %17, %cst_15 {dimension_numbers = #tpu.dot_dimension_numbers<[1], [0], [0], [1], [0, 0, 1, 1], [], []>} : vector<12x128xbf16>, vector<128x128xbf16>, vector<12x128xf32> -> vector<12x128xf32>
    %c0_16 = arith.constant 0 : index
    %c0_17 = arith.constant 0 : index
    %20 = vector.load %arg8[%c0_16, %c0_17] : memref<12x1xf32, #tpu.memory_space<vmem>>, vector<12x1xf32>
    %21 = vector.broadcast %20 : vector<12x1xf32> to vector<12x128xf32>
    %22 = arith.addf %19, %21 : vector<12x128xf32>
    %c0_18 = arith.constant 0 : index
    %c0_19 = arith.constant 0 : index
    %c0_20 = arith.constant 0 : index
    %23 = vector.load %arg9[%c0_18, %c0_19, %c0_20] : memref<1x12x128xf32, #tpu.memory_space<vmem>>, vector<1x12x128xf32>
    %24 = vector.shape_cast %23 : vector<1x12x128xf32> to vector<12x128xf32>
    %25 = vector.shape_cast %22 : vector<12x128xf32> to vector<1x12x128xf32>
    tpu.vector_store %arg9[%c0_18, %c0_19, %c0_20], %25 {strides = array<i32>} : memref<1x12x128xf32, #tpu.memory_space<vmem>>, vector<1x12x128xf32>,
    return
  }
  func.func @transform_0(%arg0: i32, %arg1: i32) -> (i32, i32, i32) {
    %c0_i32 = arith.constant 0 : i32
    %c0_i32_0 = arith.constant 0 : i32
    return %arg0, %c0_i32, %arg1 : i32, i32, i32
  }
  func.func @transform_1(%arg0: i32, %arg1: i32) -> (i32, i32) {
    %c0_i32 = arith.constant 0 : i32
    %c0_i32_0 = arith.constant 0 : i32
    %c0_i32_1 = arith.constant 0 : i32
    return %c0_i32, %c0_i32_0 : i32, i32
  }
  func.func @transform_2(%arg0: i32, %arg1: i32) -> (i32, i32) {
    %c0_i32 = arith.constant 0 : i32
    %c0_i32_0 = arith.constant 0 : i32
    %c0_i32_1 = arith.constant 0 : i32
    return %c0_i32, %c0_i32_0 : i32, i32
  }
  func.func @transform_3(%arg0: i32, %arg1: i32) -> (i32, i32) {
    %c0_i32 = arith.constant 0 : i32
    %c0_i32_0 = arith.constant 0 : i32
    %c0_i32_1 = arith.constant 0 : i32
    return %c0_i32, %c0_i32_0 : i32, i32
  }
  func.func @transform_4(%arg0: i32, %arg1: i32) -> (i32, i32) {
    %c0_i32 = arith.constant 0 : i32
    %c0_i32_0 = arith.constant 0 : i32
    %c0_i32_1 = arith.constant 0 : i32
    return %c0_i32, %c0_i32_0 : i32, i32
  }
  func.func @transform_5(%arg0: i32, %arg1: i32) -> (i32, i32) {
    %c0_i32 = arith.constant 0 : i32
    %c0_i32_0 = arith.constant 0 : i32
    %c0_i32_1 = arith.constant 0 : i32
    return %c0_i32, %c0_i32_0 : i32, i32
  }
  func.func @transform_6(%arg0: i32, %arg1: i32) -> (i32, i32) {
    %c0_i32 = arith.constant 0 : i32
    %c0_i32_0 = arith.constant 0 : i32
    %c0_i32_1 = arith.constant 0 : i32
    return %c0_i32, %c0_i32_0 : i32, i32
  }
  func.func @transform_7(%arg0: i32, %arg1: i32) -> (i32, i32, i32) {
    %c0_i32 = arith.constant 0 : i32
    %c0_i32_0 = arith.constant 0 : i32
    return %arg0, %c0_i32, %arg1 : i32, i32, i32
  }
}

</mosaic_0001>

<llo_original>
// kernel: _apply.1
$region0: #{_apply.1}
  #allocation0 [shape = 'u32[]', space=smem, size = 0x4, offset = 0x4, fixed_abs, tag = 'smem constant byte address 0x4 - core index']
  #allocation1 [shape = 'u32[144,128]{1,0:T(1,128)}', space=vmem, size = 0x12000, scoped, tag = 'internal scratch']
  %s0 = inlined_call_operand.vmem [shape: bf16[2,256,128], index: 0, kind: input, shape index: {}]
  %s1 = inlined_call_operand.vmem [shape: bf16[128,256], index: 1, kind: input, shape index: {}]
  %s2 = inlined_call_operand.vmem [shape: f32[128,1], index: 2, kind: input, shape index: {}]
  %s3 = inlined_call_operand.vmem [shape: bf16[128,128], index: 3, kind: input, shape index: {}]
  %s4 = inlined_call_operand.vmem [shape: f32[128,1], index: 4, kind: input, shape index: {}]
  %s5 = inlined_call_operand.vmem [shape: bf16[12,128], index: 5, kind: input, shape index: {}]
  %s6 = inlined_call_operand.vmem [shape: f32[12,1], index: 6, kind: input, shape index: {}]
  %s7 = inlined_call_operand.vmem [shape: f32[2,12,128], index: 7, kind: output, shape index: {}]
  %s8 = sld [smem:[#allocation0]]
  $region61: #{_apply.1} parent=0
    _
  %s10 = ssub.s32 1, %s8
  %s11 = scalar_select 0, %s10, %s8
  loop: start=0, step=1, limit=4
  $region2: #{_apply.1} parent=0 // loop_pre_header
    _
  $region3: #{_apply.1} parent=0 // loop_header
    %s13 = sphi 0, %s17
    %p14 = scmp.ge.s32.totalorder %s13, 4
    %s20 = sphi 0, %s32
    %s21 = sphi 0, %s28
    %s22 = sphi 0, %s20
    %s23 = sphi 0, %s21
    %s24 = sphi 0, %s22
    %s25 = sphi 0, %s23
    %s37 = sphi 0, %s39
    %s40 = sphi 0, %s37
    %s41 = sphi 0, %s40
    %s57 = sphi 0, %s41
    %s61 = sphi 0, %s61
    %s63 = sphi 0, %s61
    %s64 = sphi 0, %s63
    %s78 = sphi 0, %s64
    %s82 = sphi 0, %s82
    %s84 = sphi 0, %s82
    %s85 = sphi 0, %s84
    %s99 = sphi 0, %s85
    %s103 = sphi 0, %s103
    %s105 = sphi 0, %s103
    %s106 = sphi 0, %s105
    %s120 = sphi 0, %s106
    %s124 = sphi 0, %s124
    %s126 = sphi 0, %s124
    %s127 = sphi 0, %s126
    %s141 = sphi 0, %s127
    %s145 = sphi 0, %s145
    %s147 = sphi 0, %s145
    %s148 = sphi 0, %s147
    %s162 = sphi 0, %s148
    %s166 = sphi 0, %s166
    %s168 = sphi 0, %s166
    %s169 = sphi 0, %s168
    %s183 = sphi 0, %s169
    %s191 = sphi 0, %s193
    %s194 = sphi 0, %s191
    %s195 = sphi 0, %s194
    %s211 = sphi 0, %s195
  $region4: #{_apply.1} parent=0 // loop_header_branch
    %16 = sbr.rel (%p14) target = $region8
  $region5: #{_apply.1} parent=0 // loop_body
    %s18 = ssub.s32 %s13, 1
    %s19 = ssub.s32 %s13, 2
    %s26 = sadd.s32 1, %s21
    %p27 = scmp.ge.s32.totalorder %s26, 1
    %s28 = scalar_select %p27, 0, %s26
    %s29 = sadd.s32 1, %s20
    %s30 = scalar_select %p27, %s29, %s20
    %p31 = scmp.ge.s32.totalorder %s30, 2
    %s32 = scalar_select %p31, 0, %s30
    %s33 = ssub.s32 %s20, %s32
    %s34 = ssub.s32 %s21, %s28
    %s35 = sor.u32 %s33, %s34
    %p36 = scmp.eq.s32.totalorder %s35, 0
    %s38 = sadd.s32 %s37, 1
    %s39 = scalar_select %p36, %s37, %s38
    %p42 = pneg %p36
    %p43 = scmp.eq.s32.totalorder %s13, 1
    %p44 = por %p42, %p43
    %p45 = scmp.ne.s32.totalorder %s37, %s40
    %p46 = scmp.eq.s32.totalorder %s13, 0
    %p47 = por %p45, %p46
    %p48 = scmp.ne.s32.totalorder %s37, %s40
    %p49 = scmp.eq.s32.totalorder %s18, 1
    %p50 = por %p48, %p49
    %p51 = scmp.ne.s32.totalorder %s40, %s41
    %p52 = scmp.eq.s32.totalorder %s18, 0
    %p53 = por %p51, %p52
    %p54 = scmp.ne.s32.totalorder %s40, %s41
    %p55 = scmp.eq.s32.totalorder %s19, 1
    %p56 = por %p54, %p55
    %p58 = scmp.ne.s32.totalorder %s41, %s57
    %p59 = scmp.eq.s32.totalorder %s19, 0
    %p60 = por %p58, %p59
    %s62 = sadd.s32 %s61, 1
    %p65 = scmp.eq.s32.totalorder %s13, 1
    %p66 = scmp.ne.s32.totalorder %s61, %s63
    %p67 = scmp.eq.s32.totalorder %s13, 0
    %p68 = por %p66, %p67
    %p69 = scmp.ne.s32.totalorder %s61, %s63
    %p70 = scmp.eq.s32.totalorder %s18, 1
    %p71 = por %p69, %p70
    %p72 = scmp.ne.s32.totalorder %s63, %s64
    %p73 = scmp.eq.s32.totalorder %s18, 0
    %p74 = por %p72, %p73
    %p75 = scmp.ne.s32.totalorder %s63, %s64
    %p76 = scmp.eq.s32.totalorder %s19, 1
    %p77 = por %p75, %p76
    %p79 = scmp.ne.s32.totalorder %s64, %s78
    %p80 = scmp.eq.s32.totalorder %s19, 0
    %p81 = por %p79, %p80
    %s83 = sadd.s32 %s82, 1
    %p86 = scmp.eq.s32.totalorder %s13, 1
    %p87 = scmp.ne.s32.totalorder %s82, %s84
    %p88 = scmp.eq.s32.totalorder %s13, 0
    %p89 = por %p87, %p88
    %p90 = scmp.ne.s32.totalorder %s82, %s84
    %p91 = scmp.eq.s32.totalorder %s18, 1
    %p92 = por %p90, %p91
    %p93 = scmp.ne.s32.totalorder %s84, %s85
    %p94 = scmp.eq.s32.totalorder %s18, 0
    %p95 = por %p93, %p94
    %p96 = scmp.ne.s32.totalorder %s84, %s85
    %p97 = scmp.eq.s32.totalorder %s19, 1
    %p98 = por %p96, %p97
    %p100 = scmp.ne.s32.totalorder %s85, %s99
    %p101 = scmp.eq.s32.totalorder %s19, 0
    %p102 = por %p100, %p101
    %s104 = sadd.s32 %s103, 1
    %p107 = scmp.eq.s32.totalorder %s13, 1
    %p108 = scmp.ne.s32.totalorder %s103, %s105
    %p109 = scmp.eq.s32.totalorder %s13, 0
    %p110 = por %p108, %p109
    %p111 = scmp.ne.s32.totalorder %s103, %s105
    %p112 = scmp.eq.s32.totalorder %s18, 1
    %p113 = por %p111, %p112
    %p114 = scmp.ne.s32.totalorder %s105, %s106
    %p115 = scmp.eq.s32.totalorder %s18, 0
    %p116 = por %p114, %p115
    %p117 = scmp.ne.s32.totalorder %s105, %s106
    %p118 = scmp.eq.s32.totalorder %s19, 1
    %p119 = por %p117, %p118
    %p121 = scmp.ne.s32.totalorder %s106, %s120
    %p122 = scmp.eq.s32.totalorder %s19, 0
    %p123 = por %p121, %p122
    %s125 = sadd.s32 %s124, 1
    %p128 = scmp.eq.s32.totalorder %s13, 1
    %p129 = scmp.ne.s32.totalorder %s124, %s126
    %p130 = scmp.eq.s32.totalorder %s13, 0
    %p131 = por %p129, %p130
    %p132 = scmp.ne.s32.totalorder %s124, %s126
    %p133 = scmp.eq.s32.totalorder %s18, 1
    %p134 = por %p132, %p133
    %p135 = scmp.ne.s32.totalorder %s126, %s127
    %p136 = scmp.eq.s32.totalorder %s18, 0
    %p137 = por %p135, %p136
    %p138 = scmp.ne.s32.totalorder %s126, %s127
    %p139 = scmp.eq.s32.totalorder %s19, 1
    %p140 = por %p138, %p139
    %p142 = scmp.ne.s32.totalorder %s127, %s141
    %p143 = scmp.eq.s32.totalorder %s19, 0
    %p144 = por %p142, %p143
    %s146 = sadd.s32 %s145, 1
    %p149 = scmp.eq.s32.totalorder %s13, 1
    %p150 = scmp.ne.s32.totalorder %s145, %s147
    %p151 = scmp.eq.s32.totalorder %s13, 0
    %p152 = por %p150, %p151
    %p153 = scmp.ne.s32.totalorder %s145, %s147
    %p154 = scmp.eq.s32.totalorder %s18, 1
    %p155 = por %p153, %p154
    %p156 = scmp.ne.s32.totalorder %s147, %s148
    %p157 = scmp.eq.s32.totalorder %s18, 0
    %p158 = por %p156, %p157
    %p159 = scmp.ne.s32.totalorder %s147, %s148
    %p160 = scmp.eq.s32.totalorder %s19, 1
    %p161 = por %p159, %p160
    %p163 = scmp.ne.s32.totalorder %s148, %s162
    %p164 = scmp.eq.s32.totalorder %s19, 0
    %p165 = por %p163, %p164
    %s167 = sadd.s32 %s166, 1
    %p170 = scmp.eq.s32.totalorder %s13, 1
    %p171 = scmp.ne.s32.totalorder %s166, %s168
    %p172 = scmp.eq.s32.totalorder %s13, 0
    %p173 = por %p171, %p172
    %p174 = scmp.ne.s32.totalorder %s166, %s168
    %p175 = scmp.eq.s32.totalorder %s18, 1
    %p176 = por %p174, %p175
    %p177 = scmp.ne.s32.totalorder %s168, %s169
    %p178 = scmp.eq.s32.totalorder %s18, 0
    %p179 = por %p177, %p178
    %p180 = scmp.ne.s32.totalorder %s168, %s169
    %p181 = scmp.eq.s32.totalorder %s19, 1
    %p182 = por %p180, %p181
    %p184 = scmp.ne.s32.totalorder %s169, %s183
    %p185 = scmp.eq.s32.totalorder %s19, 0
    %p186 = por %p184, %p185
    %s187 = ssub.s32 %s20, %s32
    %s188 = ssub.s32 %s21, %s28
    %s189 = sor.u32 %s187, %s188
    %p190 = scmp.eq.s32.totalorder %s189, 0
    %s192 = sadd.s32 %s191, 1
    %s193 = scalar_select %p190, %s191, %s192
    %p196 = pneg %p190
    %p197 = scmp.eq.s32.totalorder %s13, 1
    %p198 = por %p196, %p197
    %p199 = scmp.ne.s32.totalorder %s191, %s194
    %p200 = scmp.eq.s32.totalorder %s13, 0
    %p201 = por %p199, %p200
    %p202 = scmp.ne.s32.totalorder %s191, %s194
    %p203 = scmp.eq.s32.totalorder %s18, 1
    %p204 = por %p202, %p203
    %p205 = scmp.ne.s32.totalorder %s194, %s195
    %p206 = scmp.eq.s32.totalorder %s18, 0
    %p207 = por %p205, %p206
    %p208 = scmp.ne.s32.totalorder %s194, %s195
    %p209 = scmp.eq.s32.totalorder %s19, 1
    %p210 = por %p208, %p209
    %p212 = scmp.ne.s32.totalorder %s195, %s211
    %p213 = scmp.eq.s32.totalorder %s19, 0
    %p214 = por %p212, %p213
    %p215 = scmp.le.s32.totalorder 1, %s13
    %p216 = scmp.lt.s32.totalorder %s13, 3
    %p217 = pnand %p215, %p216
    %p218 = pneg %p217
    // Predicated region
    $region9: #{_apply.1} parent=5 // pred_check
      _
    $region10: #{_apply.1} parent=5 // pred_check_branch
      %220 = sbr.rel (%p217) target = $region12
    $region11: #{_apply.1} parent=5 // pred_region
      %s221 = ssub.s32 %s13, 1
      // Predicated region
      $region13: #{_apply.1} parent=11 // pred_check
        %p222 = pneg %p74
      $region14: #{_apply.1} parent=11 // pred_check_branch
        %224 = sbr.rel (%p222) target = $region16
      $region15: #{_apply.1} parent=11 // pred_region
        _
      $region16: #{_apply.1} parent=11 // pred_fallthru
        _
      // Predicated region
      $region17: #{_apply.1} parent=11 // pred_check
        %p225 = pneg %p95
      $region18: #{_apply.1} parent=11 // pred_check_branch
        %227 = sbr.rel (%p225) target = $region20
      $region19: #{_apply.1} parent=11 // pred_region
        _
      $region20: #{_apply.1} parent=11 // pred_fallthru
        _
      // Predicated region
      $region21: #{_apply.1} parent=11 // pred_check
        %p228 = pneg %p116
      $region22: #{_apply.1} parent=11 // pred_check_branch
        %230 = sbr.rel (%p228) target = $region24
      $region23: #{_apply.1} parent=11 // pred_region
        _
      $region24: #{_apply.1} parent=11 // pred_fallthru
        _
      // Predicated region
      $region25: #{_apply.1} parent=11 // pred_check
        %p231 = pneg %p137
      $region26: #{_apply.1} parent=11 // pred_check_branch
        %233 = sbr.rel (%p231) target = $region28
      $region27: #{_apply.1} parent=11 // pred_region
        _
      $region28: #{_apply.1} parent=11 // pred_fallthru
        _
      // Predicated region
      $region29: #{_apply.1} parent=11 // pred_check
        %p234 = pneg %p158
      $region30: #{_apply.1} parent=11 // pred_check_branch
        %236 = sbr.rel (%p234) target = $region32
      $region31: #{_apply.1} parent=11 // pred_region
        _
      $region32: #{_apply.1} parent=11 // pred_fallthru
        _
      // Predicated region
      $region33: #{_apply.1} parent=11 // pred_check
        %p237 = pneg %p179
      $region34: #{_apply.1} parent=11 // pred_check_branch
        %239 = sbr.rel (%p237) target = $region36
      $region35: #{_apply.1} parent=11 // pred_region
        _
      $region36: #{_apply.1} parent=11 // pred_fallthru
        _
    $region12: #{_apply.1} parent=5 // pred_fallthru
      _
    %p240 = scmp.lt.s32.totalorder %s13, 2
    // Predicated region
    $region37: #{_apply.1} parent=5 // pred_check
      %p241 = pneg %p240
    $region38: #{_apply.1} parent=5 // pred_check_branch
      %243 = sbr.rel (%p241) target = $region40
    $region39: #{_apply.1} parent=5 // pred_region
      // Predicated region
      $region41: #{_apply.1} parent=39 // pred_check
        %p244 = pneg %p47
      $region42: #{_apply.1} parent=39 // pred_check_branch
        %246 = sbr.rel (%p244) target = $region44
      $region43: #{_apply.1} parent=39 // pred_region
        %p247 = scmp.lt.s32.totalorder %s20, 1
        %s248 = scalar_select %p247, %s20, 1
        %p249 = scmp.lt.s32.totalorder %s21, 0
        %s250 = scalar_select %p249, %s21, 0
        %s251 = smul.addr %s248, 32
        %s252 = sadd.s32 %s250, %s251
        %s253 = smul.addr %s252, 4
        %s254 = scalar_lea.vmem %s0, %s253
      $region44: #{_apply.1} parent=39 // pred_fallthru
        _
    $region40: #{_apply.1} parent=5 // pred_fallthru
      _
    %p255 = scmp.le.s32.totalorder 1, %s13
    %p256 = scmp.lt.s32.totalorder %s13, 3
    %p257 = pnand %p255, %p256
    %p258 = pneg %p257
    // Predicated region
    $region45: #{_apply.1} parent=5 // pred_check
      _
    $region46: #{_apply.1} parent=5 // pred_check_branch
      %260 = sbr.rel (%p257) target = $region48
    $region47: #{_apply.1} parent=5 // pred_region
      %s261 = ssub.s32 %s13, 1
      %p262 = scmp.lt.s32.totalorder %s22, 1
      %s263 = scalar_select %p262, %s22, 1
      %p264 = scmp.lt.s32.totalorder %s23, 0
      %s265 = scalar_select %p264, %s23, 0
      %s266 = smul.addr %s263, 32
      %s267 = sadd.s32 %s265, %s266
      %s268 = smul.addr %s267, 4
      %s269 = scalar_lea.vmem %s0, %s268
      %p270 = pneg %p53
      %p271 = pneg %p50
      %p272 = pneg %p74
      %p273 = pneg %p71
      %p274 = pneg %p95
      %p275 = pneg %p92
      %p276 = pneg %p116
      %p277 = pneg %p113
      %p278 = pneg %p137
      %p279 = pneg %p134
      %p280 = pneg %p158
      %p281 = pneg %p155
      %p282 = pneg %p179
      %p283 = pneg %p176
      %p284 = pneg %p207
      %p285 = pneg %p204
      %p286 = scmp.lt.s32.totalorder %s22, 1
      %s287 = scalar_select %p286, %s22, 1
      %p288 = scmp.lt.s32.totalorder %s23, 0
      %s289 = scalar_select %p288, %s23, 0
      %s290 = smul.addr %s287, 2
      %s291 = sadd.s32 %s289, %s290
      %s292 = smul.addr %s291, 8
      %s293 = scalar_lea.vmem %s7, %s292
      %p294 = scmp.lt.s32.totalorder %s22, 1
      %s295 = scalar_select %p294, %s22, 1
      %p296 = scmp.lt.s32.totalorder %s23, 0
      %s297 = scalar_select %p296, %s23, 0
      %s298 = smul.addr %s295, 32
      %s299 = sadd.s32 %s297, %s298
      %s300 = smul.addr %s299, 4
      %s301 = scalar_lea.vmem %s0, %s300
      %p302 = scmp.lt.s32.totalorder %s22, 1
      %s303 = scalar_select %p302, %s22, 1
      %p304 = scmp.lt.s32.totalorder %s23, 0
      %s305 = scalar_select %p304, %s23, 0
      %s306 = smul.addr %s303, 2
      %s307 = sadd.s32 %s305, %s306
      %s308 = smul.addr %s307, 8
      %s309 = scalar_lea.vmem %s7, %s308
      %v311 = vld [vmem:[%s301] sm:$0xf]
      %v312 = vld [vmem:[%s301 + $0x4] sm:$0xf]
      %v313 = vld [vmem:[%s301 + $0x8] sm:$0xf]
      %v314 = vld [vmem:[%s301 + $0xc] sm:$0xf]
      %v315 = vld [vmem:[%s301 + $0x10] sm:$0xf]
      %v316 = vld [vmem:[%s301 + $0x14] sm:$0xf]
      %v317 = vld [vmem:[%s301 + $0x18] sm:$0xf]
      %v318 = vld [vmem:[%s301 + $0x1c] sm:$0xf]
      %v319 = vld [vmem:[%s301 + $0x20] sm:$0xf]
      %v320 = vld [vmem:[%s301 + $0x24] sm:$0xf]
      %v321 = vld [vmem:[%s301 + $0x28] sm:$0xf]
      %v322 = vld [vmem:[%s301 + $0x2c] sm:$0xf]
      %v323 = vld [vmem:[%s301 + $0x30] sm:$0xf]
      %v324 = vld [vmem:[%s301 + $0x34] sm:$0xf]
      %v325 = vld [vmem:[%s301 + $0x38] sm:$0xf]
      %v326 = vld [vmem:[%s301 + $0x3c] sm:$0xf]
      %v327 = vld [vmem:[%s301 + $0x40] sm:$0xf]
      %v328 = vld [vmem:[%s301 + $0x44] sm:$0xf]
      %v329 = vld [vmem:[%s301 + $0x48] sm:$0xf]
      %v330 = vld [vmem:[%s301 + $0x4c] sm:$0xf]
      %v331 = vld [vmem:[%s301 + $0x50] sm:$0xf]
      %v332 = vld [vmem:[%s301 + $0x54] sm:$0xf]
      %v333 = vld [vmem:[%s301 + $0x58] sm:$0xf]
      %v334 = vld [vmem:[%s301 + $0x5c] sm:$0xf]
      %v335 = vld [vmem:[%s301 + $0x60] sm:$0xf]
      %v336 = vld [vmem:[%s301 + $0x64] sm:$0xf]
      %v337 = vld [vmem:[%s301 + $0x68] sm:$0xf]
      %v338 = vld [vmem:[%s301 + $0x6c] sm:$0xf]
      %v339 = vld [vmem:[%s301 + $0x70] sm:$0xf]
      %v340 = vld [vmem:[%s301 + $0x74] sm:$0xf]
      %v341 = vld [vmem:[%s301 + $0x78] sm:$0xf]
      %v342 = vld [vmem:[%s301 + $0x7c] sm:$0xf]
      %v343 = vld [vmem:[%s1] sm:$0xff]
      %v344 = vld [vmem:[%s1 + $0x8] sm:$0xff]
      %v345 = vld [vmem:[%s1 + $0x10] sm:$0xff]
      %v346 = vld [vmem:[%s1 + $0x18] sm:$0xff]
      %v347 = vld [vmem:[%s1 + $0x20] sm:$0xff]
      %v348 = vld [vmem:[%s1 + $0x28] sm:$0xff]
      %v349 = vld [vmem:[%s1 + $0x30] sm:$0xff]
      %v350 = vld [vmem:[%s1 + $0x38] sm:$0xff]
      %v351 = vld [vmem:[%s1 + $0x40] sm:$0xff]
      %v352 = vld [vmem:[%s1 + $0x48] sm:$0xff]
      %v353 = vld [vmem:[%s1 + $0x50] sm:$0xff]
      %v354 = vld [vmem:[%s1 + $0x58] sm:$0xff]
      %v355 = vld [vmem:[%s1 + $0x60] sm:$0xff]
      %v356 = vld [vmem:[%s1 + $0x68] sm:$0xff]
      %v357 = vld [vmem:[%s1 + $0x70] sm:$0xff]
      %v358 = vld [vmem:[%s1 + $0x78] sm:$0xff]
      %v359 = vld [vmem:[%s2] sm:$0xff]
      %v360 = vld [vmem:[%s2 + $0x8] sm:$0xff]
      %v361 = vld [vmem:[%s2 + $0x10] sm:$0xff]
      %v362 = vld [vmem:[%s2 + $0x18] sm:$0xff]
      %v363 = vld [vmem:[%s2 + $0x20] sm:$0xff]
      %v364 = vld [vmem:[%s2 + $0x28] sm:$0xff]
      %v365 = vld [vmem:[%s2 + $0x30] sm:$0xff]
      %v366 = vld [vmem:[%s2 + $0x38] sm:$0xff]
      %v367 = vld [vmem:[%s2 + $0x40] sm:$0xff]
      %v368 = vld [vmem:[%s2 + $0x48] sm:$0xff]
      %v369 = vld [vmem:[%s2 + $0x50] sm:$0xff]
      %v370 = vld [vmem:[%s2 + $0x58] sm:$0xff]
      %v371 = vld [vmem:[%s2 + $0x60] sm:$0xff]
      %v372 = vld [vmem:[%s2 + $0x68] sm:$0xff]
      %v373 = vld [vmem:[%s2 + $0x70] sm:$0xff]
      %v374 = vld [vmem:[%s2 + $0x78] sm:$0xff]
      %376 = vset.pattern.permute.xlu0 0
      %377 = vperm.xlu0 %376, %v359
      %v378 = vpop.permute.xlu0 %377
      %381 = vset.pattern.permute.xlu0 0
      %382 = vperm.xlu0 %381, %v360
      %v383 = vpop.permute.xlu0 %382
      %386 = vset.pattern.permute.xlu0 0
      %387 = vperm.xlu0 %386, %v361
      %v388 = vpop.permute.xlu0 %387
      %391 = vset.pattern.permute.xlu0 0
      %392 = vperm.xlu0 %391, %v362
      %v393 = vpop.permute.xlu0 %392
      %396 = vset.pattern.permute.xlu0 0
      %397 = vperm.xlu0 %396, %v363
      %v398 = vpop.permute.xlu0 %397
      %401 = vset.pattern.permute.xlu0 0
      %402 = vperm.xlu0 %401, %v364
      %v403 = vpop.permute.xlu0 %402
      %406 = vset.pattern.permute.xlu0 0
      %407 = vperm.xlu0 %406, %v365
      %v408 = vpop.permute.xlu0 %407
      %411 = vset.pattern.permute.xlu0 0
      %412 = vperm.xlu0 %411, %v366
      %v413 = vpop.permute.xlu0 %412
      %416 = vset.pattern.permute.xlu0 0
      %417 = vperm.xlu0 %416, %v367
      %v418 = vpop.permute.xlu0 %417
      %421 = vset.pattern.permute.xlu0 0
      %422 = vperm.xlu0 %421, %v368
      %v423 = vpop.permute.xlu0 %422
      %426 = vset.pattern.permute.xlu0 0
      %427 = vperm.xlu0 %426, %v369
      %v428 = vpop.permute.xlu0 %427
      %431 = vset.pattern.permute.xlu0 0
      %432 = vperm.xlu0 %431, %v370
      %v433 = vpop.permute.xlu0 %432
      %436 = vset.pattern.permute.xlu0 0
      %437 = vperm.xlu0 %436, %v371
      %v438 = vpop.permute.xlu0 %437
      %441 = vset.pattern.permute.xlu0 0
      %442 = vperm.xlu0 %441, %v372
      %v443 = vpop.permute.xlu0 %442
      %446 = vset.pattern.permute.xlu0 0
      %447 = vperm.xlu0 %446, %v373
      %v448 = vpop.permute.xlu0 %447
      %451 = vset.pattern.permute.xlu0 0
      %452 = vperm.xlu0 %451, %v374
      %v453 = vpop.permute.xlu0 %452
      %v471 = vunpack.c.l.b16 %v343
      %v472 = vunpack.c.h.b16 %v343
      %v473 = vunpack.c.l.b16 %v344
      %v474 = vunpack.c.h.b16 %v344
      %v475 = vunpack.c.l.b16 %v345
      %v476 = vunpack.c.h.b16 %v345
      %v477 = vunpack.c.l.b16 %v346
      %v478 = vunpack.c.h.b16 %v346
      %v479 = vunpack.c.l.b16 %v347
      %v480 = vunpack.c.h.b16 %v347
      %v481 = vunpack.c.l.b16 %v348
      %v482 = vunpack.c.h.b16 %v348
      %v483 = vunpack.c.l.b16 %v349
      %v484 = vunpack.c.h.b16 %v349
      %v485 = vunpack.c.l.b16 %v350
      %v486 = vunpack.c.h.b16 %v350
      %v487 = vunpack.c.l.b16 %v351
      %v488 = vunpack.c.h.b16 %v351
      %v489 = vunpack.c.l.b16 %v352
      %v490 = vunpack.c.h.b16 %v352
      %v491 = vunpack.c.l.b16 %v353
      %v492 = vunpack.c.h.b16 %v353
      %v493 = vunpack.c.l.b16 %v354
      %v494 = vunpack.c.h.b16 %v354
      %v495 = vunpack.c.l.b16 %v355
      %v496 = vunpack.c.h.b16 %v355
      %v497 = vunpack.c.l.b16 %v356
      %v498 = vunpack.c.h.b16 %v356
      %v499 = vunpack.c.l.b16 %v357
      %v500 = vunpack.c.h.b16 %v357
      %v501 = vunpack.c.l.b16 %v358
      %v502 = vunpack.c.h.b16 %v358
      %v503 = vpack.c.b16 %v473, %v471
      %v504 = vpack.c.b16 %v474, %v472
      %v505 = vpack.c.b16 %v477, %v475
      %v506 = vpack.c.b16 %v478, %v476
      %v507 = vpack.c.b16 %v481, %v479
      %v508 = vpack.c.b16 %v482, %v480
      %v509 = vpack.c.b16 %v485, %v483
      %v510 = vpack.c.b16 %v486, %v484
      %v511 = vpack.c.b16 %v489, %v487
      %v512 = vpack.c.b16 %v490, %v488
      %v513 = vpack.c.b16 %v493, %v491
      %v514 = vpack.c.b16 %v494, %v492
      %v515 = vpack.c.b16 %v497, %v495
      %v516 = vpack.c.b16 %v498, %v496
      %v517 = vpack.c.b16 %v501, %v499
      %v518 = vpack.c.b16 %v502, %v500
      %v567 = vunpack.c.l.b16 %v311
      %v568 = vunpack.c.l.b16 %v312
      %v569 = vunpack.c.l.b16 %v313
      %v570 = vunpack.c.l.b16 %v314
      %v571 = vunpack.c.l.b16 %v315
      %v572 = vunpack.c.l.b16 %v316
      %v573 = vunpack.c.l.b16 %v317
      %v574 = vunpack.c.l.b16 %v318
      %v575 = vunpack.c.l.b16 %v319
      %v576 = vunpack.c.l.b16 %v320
      %v577 = vunpack.c.l.b16 %v321
      %v578 = vunpack.c.l.b16 %v322
      %v579 = vunpack.c.l.b16 %v323
      %v580 = vunpack.c.l.b16 %v324
      %v581 = vunpack.c.l.b16 %v325
      %v582 = vunpack.c.l.b16 %v326
      %v583 = vunpack.c.l.b16 %v327
      %v584 = vunpack.c.l.b16 %v328
      %v585 = vunpack.c.l.b16 %v329
      %v586 = vunpack.c.l.b16 %v330
      %v587 = vunpack.c.l.b16 %v331
      %v588 = vunpack.c.l.b16 %v332
      %v589 = vunpack.c.l.b16 %v333
      %v590 = vunpack.c.l.b16 %v334
      %v591 = vunpack.c.l.b16 %v335
      %v592 = vunpack.c.l.b16 %v336
      %v593 = vunpack.c.l.b16 %v337
      %v594 = vunpack.c.l.b16 %v338
      %v595 = vunpack.c.l.b16 %v339
      %v596 = vunpack.c.l.b16 %v340
      %v597 = vunpack.c.l.b16 %v341
      %v598 = vunpack.c.l.b16 %v342
      %v599 = vpack.c.b16 %v568, %v567
      %v600 = vpack.c.b16 %v570, %v569
      %v601 = vpack.c.b16 %v572, %v571
      %v602 = vpack.c.b16 %v574, %v573
      %v603 = vpack.c.b16 %v576, %v575
      %v604 = vpack.c.b16 %v578, %v577
      %v605 = vpack.c.b16 %v580, %v579
      %v606 = vpack.c.b16 %v582, %v581
      %v607 = vpack.c.b16 %v584, %v583
      %v608 = vpack.c.b16 %v586, %v585
      %v609 = vpack.c.b16 %v588, %v587
      %v610 = vpack.c.b16 %v590, %v589
      %v611 = vpack.c.b16 %v592, %v591
      %v612 = vpack.c.b16 %v594, %v593
      %v613 = vpack.c.b16 %v596, %v595
      %v614 = vpack.c.b16 %v598, %v597
      %631 = vmatprep.subr.bf16.mxu0 0
      %632 = vmatpush1.bf16.msra.mxu0 %v599
      %633 = vmatprep.subr.bf16.mxu0 0
      %634 = vmatpush1.bf16.msra.mxu0 %v600
      %635 = vmatprep.subr.bf16.mxu0 0
      %636 = vmatpush1.bf16.msra.mxu0 %v601
      %637 = vmatprep.subr.bf16.mxu0 0
      %638 = vmatpush1.bf16.msra.mxu0 %v602
      %639 = vmatprep.subr.bf16.mxu0 0
      %640 = vmatpush1.bf16.msra.mxu0 %v603
      %641 = vmatprep.subr.bf16.mxu0 0
      %642 = vmatpush1.bf16.msra.mxu0 %v604
      %643 = vmatprep.subr.bf16.mxu0 0
      %644 = vmatpush1.bf16.msra.mxu0 %v605
      %645 = vmatprep.subr.bf16.mxu0 0
      %646 = vmatpush1.bf16.msra.mxu0 %v606
      %647 = vmatprep.subr.bf16.mxu0 0
      %648 = vmatpush1.bf16.msra.mxu0 %v607
      %649 = vmatprep.subr.bf16.mxu0 0
      %650 = vmatpush1.bf16.msra.mxu0 %v608
      %651 = vmatprep.subr.bf16.mxu0 0
      %652 = vmatpush1.bf16.msra.mxu0 %v609
      %653 = vmatprep.subr.bf16.mxu0 0
      %654 = vmatpush1.bf16.msra.mxu0 %v610
      %655 = vmatprep.subr.bf16.mxu0 0
      %656 = vmatpush1.bf16.msra.mxu0 %v611
      %657 = vmatprep.subr.bf16.mxu0 0
      %658 = vmatpush1.bf16.msra.mxu0 %v612
      %659 = vmatprep.subr.bf16.mxu0 0
      %660 = vmatpush1.bf16.msra.mxu0 %v613
      %661 = vmatprep.subr.bf16.mxu0 0
      %662 = vmatpush1.bf16.msra.mxu0 %v614
      %663 = vmatprep.mubr.bf16.mxu0 %v504
      %664 = vmatmul.mubr.bf16.gmra.mrb[0].mxu0 %v503
      %v665 = vpop.f32.mrb[0].mxu0
      %v666 = vadd.f32 %v378, %v665
      %v667 = vpop.f32.mrb[0].mxu0
      %v668 = vpop.f32.mrb[0].mxu0
      %v669 = vadd.f32 %v383, %v668
      %v670 = vpop.f32.mrb[0].mxu0
      %671 = vmatprep.mubr.bf16.mxu0 %v506
      %672 = vmatmul.mubr.bf16.gmra.mrb[0].mxu0 %v505
      %v673 = vpop.f32.mrb[0].mxu0
      %v674 = vadd.f32 %v388, %v673
      %v675 = vpop.f32.mrb[0].mxu0
      %v676 = vpop.f32.mrb[0].mxu0
      %v677 = vadd.f32 %v393, %v676
      %v678 = vpop.f32.mrb[0].mxu0
      %679 = vmatprep.mubr.bf16.mxu0 %v508
      %680 = vmatmul.mubr.bf16.gmra.mrb[0].mxu0 %v507
      %v681 = vpop.f32.mrb[0].mxu0
      %v682 = vadd.f32 %v398, %v681
      %v683 = vpop.f32.mrb[0].mxu0
      %v684 = vpop.f32.mrb[0].mxu0
      %v685 = vadd.f32 %v403, %v684
      %v686 = vpop.f32.mrb[0].mxu0
      %687 = vmatprep.mubr.bf16.mxu0 %v510
      %688 = vmatmul.mubr.bf16.gmra.mrb[0].mxu0 %v509
      %v689 = vpop.f32.mrb[0].mxu0
      %v690 = vadd.f32 %v408, %v689
      %v691 = vpop.f32.mrb[0].mxu0
      %v692 = vpop.f32.mrb[0].mxu0
      %v693 = vadd.f32 %v413, %v692
      %v694 = vpop.f32.mrb[0].mxu0
      %695 = vmatprep.mubr.bf16.mxu0 %v512
      %696 = vmatmul.mubr.bf16.gmra.mrb[0].mxu0 %v511
      %v697 = vpop.f32.mrb[0].mxu0
      %v698 = vadd.f32 %v418, %v697
      %v699 = vpop.f32.mrb[0].mxu0
      %v700 = vpop.f32.mrb[0].mxu0
      %v701 = vadd.f32 %v423, %v700
      %v702 = vpop.f32.mrb[0].mxu0
      %703 = vmatprep.mubr.bf16.mxu0 %v514
      %704 = vmatmul.mubr.bf16.gmra.mrb[0].mxu0 %v513
      %v705 = vpop.f32.mrb[0].mxu0
      %v706 = vadd.f32 %v428, %v705
      %v707 = vpop.f32.mrb[0].mxu0
      %v708 = vpop.f32.mrb[0].mxu0
      %v709 = vadd.f32 %v433, %v708
      %v710 = vpop.f32.mrb[0].mxu0
      %711 = vmatprep.mubr.bf16.mxu0 %v516
      %712 = vmatmul.mubr.bf16.gmra.mrb[0].mxu0 %v515
      %v713 = vpop.f32.mrb[0].mxu0
      %v714 = vadd.f32 %v438, %v713
      %v715 = vpop.f32.mrb[0].mxu0
      %v716 = vpop.f32.mrb[0].mxu0
      %v717 = vadd.f32 %v443, %v716
      %v718 = vpop.f32.mrb[0].mxu0
      %719 = vmatprep.mubr.bf16.mxu0 %v518
      %720 = vmatmul.mubr.bf16.gmra.mrb[0].mxu0 %v517
      %v721 = vpop.f32.mrb[0].mxu0
      %v722 = vadd.f32 %v448, %v721
      %v723 = vpop.f32.mrb[0].mxu0
      %v724 = vpop.f32.mrb[0].mxu0
      %v725 = vadd.f32 %v453, %v724
      %v726 = vpop.f32.mrb[0].mxu0
      %727 = vdwg.mxu0
      %v728 = vmax.f32 %v666, 0.0
      %v729 = vmax.f32 %v669, 0.0
      %v730 = vmax.f32 %v674, 0.0
      %v731 = vmax.f32 %v677, 0.0
      %v732 = vmax.f32 %v682, 0.0
      %v733 = vmax.f32 %v685, 0.0
      %v734 = vmax.f32 %v690, 0.0
      %v735 = vmax.f32 %v693, 0.0
      %v736 = vmax.f32 %v698, 0.0
      %v737 = vmax.f32 %v701, 0.0
      %v738 = vmax.f32 %v706, 0.0
      %v739 = vmax.f32 %v709, 0.0
      %v740 = vmax.f32 %v714, 0.0
      %v741 = vmax.f32 %v717, 0.0
      %v742 = vmax.f32 %v722, 0.0
      %v743 = vmax.f32 %v725, 0.0
      %v744 = vpack.c.bf16 %v729, %v728
      %v745 = vpack.c.bf16 %v731, %v730
      %v746 = vpack.c.bf16 %v733, %v732
      %v747 = vpack.c.bf16 %v735, %v734
      %v748 = vpack.c.bf16 %v737, %v736
      %v749 = vpack.c.bf16 %v739, %v738
      %v750 = vpack.c.bf16 %v741, %v740
      %v751 = vpack.c.bf16 %v743, %v742
      %v752 = vld [vmem:[%s3] sm:$0xf]
      %v753 = vld [vmem:[%s3 + $0x4] sm:$0xf]
      %v754 = vld [vmem:[%s3 + $0x8] sm:$0xf]
      %v755 = vld [vmem:[%s3 + $0xc] sm:$0xf]
      %v756 = vld [vmem:[%s3 + $0x10] sm:$0xf]
      %v757 = vld [vmem:[%s3 + $0x14] sm:$0xf]
      %v758 = vld [vmem:[%s3 + $0x18] sm:$0xf]
      %v759 = vld [vmem:[%s3 + $0x1c] sm:$0xf]
      %v760 = vld [vmem:[%s3 + $0x20] sm:$0xf]
      %v761 = vld [vmem:[%s3 + $0x24] sm:$0xf]
      %v762 = vld [vmem:[%s3 + $0x28] sm:$0xf]
      %v763 = vld [vmem:[%s3 + $0x2c] sm:$0xf]
      %v764 = vld [vmem:[%s3 + $0x30] sm:$0xf]
      %v765 = vld [vmem:[%s3 + $0x34] sm:$0xf]
      %v766 = vld [vmem:[%s3 + $0x38] sm:$0xf]
      %v767 = vld [vmem:[%s3 + $0x3c] sm:$0xf]
      %v768 = vld [vmem:[%s4] sm:$0xff]
      %v769 = vld [vmem:[%s4 + $0x8] sm:$0xff]
      %v770 = vld [vmem:[%s4 + $0x10] sm:$0xff]
      %v771 = vld [vmem:[%s4 + $0x18] sm:$0xff]
      %v772 = vld [vmem:[%s4 + $0x20] sm:$0xff]
      %v773 = vld [vmem:[%s4 + $0x28] sm:$0xff]
      %v774 = vld [vmem:[%s4 + $0x30] sm:$0xff]
      %v775 = vld [vmem:[%s4 + $0x38] sm:$0xff]
      %v776 = vld [vmem:[%s4 + $0x40] sm:$0xff]
      %v777 = vld [vmem:[%s4 + $0x48] sm:$0xff]
      %v778 = vld [vmem:[%s4 + $0x50] sm:$0xff]
      %v779 = vld [vmem:[%s4 + $0x58] sm:$0xff]
      %v780 = vld [vmem:[%s4 + $0x60] sm:$0xff]
      %v781 = vld [vmem:[%s4 + $0x68] sm:$0xff]
      %v782 = vld [vmem:[%s4 + $0x70] sm:$0xff]
      %v783 = vld [vmem:[%s4 + $0x78] sm:$0xff]
      %785 = vset.pattern.permute.xlu0 0
      %786 = vperm.xlu0 %785, %v768
      %v787 = vpop.permute.xlu0 %786
      %790 = vset.pattern.permute.xlu0 0
      %791 = vperm.xlu0 %790, %v769
      %v792 = vpop.permute.xlu0 %791
      %795 = vset.pattern.permute.xlu0 0
      %796 = vperm.xlu0 %795, %v770
      %v797 = vpop.permute.xlu0 %796
      %800 = vset.pattern.permute.xlu0 0
      %801 = vperm.xlu0 %800, %v771
      %v802 = vpop.permute.xlu0 %801
      %805 = vset.pattern.permute.xlu0 0
      %806 = vperm.xlu0 %805, %v772
      %v807 = vpop.permute.xlu0 %806
      %810 = vset.pattern.permute.xlu0 0
      %811 = vperm.xlu0 %810, %v773
      %v812 = vpop.permute.xlu0 %811
      %815 = vset.pattern.permute.xlu0 0
      %816 = vperm.xlu0 %815, %v774
      %v817 = vpop.permute.xlu0 %816
      %820 = vset.pattern.permute.xlu0 0
      %821 = vperm.xlu0 %820, %v775
      %v822 = vpop.permute.xlu0 %821
      %825 = vset.pattern.permute.xlu0 0
      %826 = vperm.xlu0 %825, %v776
      %v827 = vpop.permute.xlu0 %826
      %830 = vset.pattern.permute.xlu0 0
      %831 = vperm.xlu0 %830, %v777
      %v832 = vpop.permute.xlu0 %831
      %835 = vset.pattern.permute.xlu0 0
      %836 = vperm.xlu0 %835, %v778
      %v837 = vpop.permute.xlu0 %836
      %840 = vset.pattern.permute.xlu0 0
      %841 = vperm.xlu0 %840, %v779
      %v842 = vpop.permute.xlu0 %841
      %845 = vset.pattern.permute.xlu0 0
      %846 = vperm.xlu0 %845, %v780
      %v847 = vpop.permute.xlu0 %846
      %850 = vset.pattern.permute.xlu0 0
      %851 = vperm.xlu0 %850, %v781
      %v852 = vpop.permute.xlu0 %851
      %855 = vset.pattern.permute.xlu0 0
      %856 = vperm.xlu0 %855, %v782
      %v857 = vpop.permute.xlu0 %856
      %860 = vset.pattern.permute.xlu0 0
      %861 = vperm.xlu0 %860, %v783
      %v862 = vpop.permute.xlu0 %861
      %v880 = vunpack.c.l.b16 %v752
      %v881 = vunpack.c.l.b16 %v753
      %v882 = vunpack.c.l.b16 %v754
      %v883 = vunpack.c.l.b16 %v755
      %v884 = vunpack.c.l.b16 %v756
      %v885 = vunpack.c.l.b16 %v757
      %v886 = vunpack.c.l.b16 %v758
      %v887 = vunpack.c.l.b16 %v759
      %v888 = vunpack.c.l.b16 %v760
      %v889 = vunpack.c.l.b16 %v761
      %v890 = vunpack.c.l.b16 %v762
      %v891 = vunpack.c.l.b16 %v763
      %v892 = vunpack.c.l.b16 %v764
      %v893 = vunpack.c.l.b16 %v765
      %v894 = vunpack.c.l.b16 %v766
      %v895 = vunpack.c.l.b16 %v767
      %v896 = vpack.c.b16 %v881, %v880
      %v897 = vpack.c.b16 %v883, %v882
      %v898 = vpack.c.b16 %v885, %v884
      %v899 = vpack.c.b16 %v887, %v886
      %v900 = vpack.c.b16 %v889, %v888
      %v901 = vpack.c.b16 %v891, %v890
      %v902 = vpack.c.b16 %v893, %v892
      %v903 = vpack.c.b16 %v895, %v894
      %912 = vmatprep.subr.bf16.mxu0 0
      %913 = vmatpush1.bf16.msra.mxu0 %v744
      %914 = vmatprep.subr.bf16.mxu0 0
      %915 = vmatpush1.bf16.msra.mxu0 %v745
      %916 = vmatprep.subr.bf16.mxu0 0
      %917 = vmatpush1.bf16.msra.mxu0 %v746
      %918 = vmatprep.subr.bf16.mxu0 0
      %919 = vmatpush1.bf16.msra.mxu0 %v747
      %920 = vmatprep.subr.bf16.mxu0 0
      %921 = vmatpush1.bf16.msra.mxu0 %v748
      %922 = vmatprep.subr.bf16.mxu0 0
      %923 = vmatpush1.bf16.msra.mxu0 %v749
      %924 = vmatprep.subr.bf16.mxu0 0
      %925 = vmatpush1.bf16.msra.mxu0 %v750
      %926 = vmatprep.subr.bf16.mxu0 0
      %927 = vmatpush1.bf16.msra.mxu0 %v751
      %928 = vmatprep.subr.bf16.mxu0 0
      %929 = vmatpush1.bf16.msra.mxu0 0
      %930 = vmatprep.subr.bf16.mxu0 0
      %931 = vmatpush1.bf16.msra.mxu0 0
      %932 = vmatprep.subr.bf16.mxu0 0
      %933 = vmatpush1.bf16.msra.mxu0 0
      %934 = vmatprep.subr.bf16.mxu0 0
      %935 = vmatpush1.bf16.msra.mxu0 0
      %936 = vmatprep.subr.bf16.mxu0 0
      %937 = vmatpush1.bf16.msra.mxu0 0
      %938 = vmatprep.subr.bf16.mxu0 0
      %939 = vmatpush1.bf16.msra.mxu0 0
      %940 = vmatprep.subr.bf16.mxu0 0
      %941 = vmatpush1.bf16.msra.mxu0 0
      %942 = vmatprep.subr.bf16.mxu0 0
      %943 = vmatpush1.bf16.msra.mxu0 0
      %944 = vmatprep.mubr.bf16.mxu0 0
      %945 = vmatmul.mubr.bf16.gmra.mrb[0].mxu0 %v896
      %v946 = vpop.f32.mrb[0].mxu0
      %v947 = vadd.f32 %v787, %v946
      %v948 = vpop.f32.mrb[0].mxu0
      %v949 = vpop.f32.mrb[0].mxu0
      %v950 = vadd.f32 %v792, %v949
      %v951 = vpop.f32.mrb[0].mxu0
      %952 = vmatprep.mubr.bf16.mxu0 0
      %953 = vmatmul.mubr.bf16.gmra.mrb[0].mxu0 %v897
      %v954 = vpop.f32.mrb[0].mxu0
      %v955 = vadd.f32 %v797, %v954
      %v956 = vpop.f32.mrb[0].mxu0
      %v957 = vpop.f32.mrb[0].mxu0
      %v958 = vadd.f32 %v802, %v957
      %v959 = vpop.f32.mrb[0].mxu0
      %960 = vmatprep.mubr.bf16.mxu0 0
      %961 = vmatmul.mubr.bf16.gmra.mrb[0].mxu0 %v898
      %v962 = vpop.f32.mrb[0].mxu0
      %v963 = vadd.f32 %v807, %v962
      %v964 = vpop.f32.mrb[0].mxu0
      %v965 = vpop.f32.mrb[0].mxu0
      %v966 = vadd.f32 %v812, %v965
      %v967 = vpop.f32.mrb[0].mxu0
      %968 = vmatprep.mubr.bf16.mxu0 0
      %969 = vmatmul.mubr.bf16.gmra.mrb[0].mxu0 %v899
      %v970 = vpop.f32.mrb[0].mxu0
      %v971 = vadd.f32 %v817, %v970
      %v972 = vpop.f32.mrb[0].mxu0
      %v973 = vpop.f32.mrb[0].mxu0
      %v974 = vadd.f32 %v822, %v973
      %v975 = vpop.f32.mrb[0].mxu0
      %976 = vmatprep.mubr.bf16.mxu0 0
      %977 = vmatmul.mubr.bf16.gmra.mrb[0].mxu0 %v900
      %v978 = vpop.f32.mrb[0].mxu0
      %v979 = vadd.f32 %v827, %v978
      %v980 = vpop.f32.mrb[0].mxu0
      %v981 = vpop.f32.mrb[0].mxu0
      %v982 = vadd.f32 %v832, %v981
      %v983 = vpop.f32.mrb[0].mxu0
      %984 = vmatprep.mubr.bf16.mxu0 0
      %985 = vmatmul.mubr.bf16.gmra.mrb[0].mxu0 %v901
      %v986 = vpop.f32.mrb[0].mxu0
      %v987 = vadd.f32 %v837, %v986
      %v988 = vpop.f32.mrb[0].mxu0
      %v989 = vpop.f32.mrb[0].mxu0
      %v990 = vadd.f32 %v842, %v989
      %v991 = vpop.f32.mrb[0].mxu0
      %992 = vmatprep.mubr.bf16.mxu0 0
      %993 = vmatmul.mubr.bf16.gmra.mrb[0].mxu0 %v902
      %v994 = vpop.f32.mrb[0].mxu0
      %v995 = vadd.f32 %v847, %v994
      %v996 = vpop.f32.mrb[0].mxu0
      %v997 = vpop.f32.mrb[0].mxu0
      %v998 = vadd.f32 %v852, %v997
      %v999 = vpop.f32.mrb[0].mxu0
      %1000 = vmatprep.mubr.bf16.mxu0 0
      %1001 = vmatmul.mubr.bf16.gmra.mrb[0].mxu0 %v903
      %v1002 = vpop.f32.mrb[0].mxu0
      %v1003 = vadd.f32 %v857, %v1002
      %v1004 = vpop.f32.mrb[0].mxu0
      %v1005 = vpop.f32.mrb[0].mxu0
      %v1006 = vadd.f32 %v862, %v1005
      %v1007 = vpop.f32.mrb[0].mxu0
      %1008 = vdwg.mxu0
      %v1009 = vmax.f32 %v947, 0.0
      %v1010 = vmax.f32 %v950, 0.0
      %v1011 = vmax.f32 %v955, 0.0
      %v1012 = vmax.f32 %v958, 0.0
      %v1013 = vmax.f32 %v963, 0.0
      %v1014 = vmax.f32 %v966, 0.0
      %v1015 = vmax.f32 %v971, 0.0
      %v1016 = vmax.f32 %v974, 0.0
      %v1017 = vmax.f32 %v979, 0.0
      %v1018 = vmax.f32 %v982, 0.0
      %v1019 = vmax.f32 %v987, 0.0
      %v1020 = vmax.f32 %v990, 0.0
      %v1021 = vmax.f32 %v995, 0.0
      %v1022 = vmax.f32 %v998, 0.0
      %v1023 = vmax.f32 %v1003, 0.0
      %v1024 = vmax.f32 %v1006, 0.0
      %v1025 = vpack.c.bf16 %v1010, %v1009
      %v1026 = vpack.c.bf16 %v1012, %v1011
      %v1027 = vpack.c.bf16 %v1014, %v1013
      %v1028 = vpack.c.bf16 %v1016, %v1015
      %v1029 = vpack.c.bf16 %v1018, %v1017
      %v1030 = vpack.c.bf16 %v1020, %v1019
      %v1031 = vpack.c.bf16 %v1022, %v1021
      %v1032 = vpack.c.bf16 %v1024, %v1023
      %v1033 = vld [vmem:[%s5] sm:$0xf]
      %v1034 = vld [vmem:[%s5 + $0x4] sm:$0x3]
      %v1035 = vld [vmem:[%s6] sm:$0xff]
      %v1036 = vld [vmem:[%s6 + $0x8] sm:$0xf]
      %1038 = vset.pattern.permute.xlu0 0
      %1039 = vperm.xlu0 %1038, %v1035
      %v1040 = vpop.permute.xlu0 %1039
      %1043 = vset.pattern.permute.xlu0 0
      %1044 = vperm.xlu0 %1043, %v1036
      %v1045 = vpop.permute.xlu0 %1044
      %v1049 = vunpack.c.l.b16 %v1033
      %v1050 = vunpack.c.l.b16 %v1034
      %v1051 = vpack.c.b16 %v1050, %v1049
      %1053 = vmatprep.subr.bf16.mxu0 0
      %1054 = vmatpush1.bf16.msra.mxu0 %v1025
      %1055 = vmatprep.subr.bf16.mxu0 0
      %1056 = vmatpush1.bf16.msra.mxu0 %v1026
      %1057 = vmatprep.subr.bf16.mxu0 0
      %1058 = vmatpush1.bf16.msra.mxu0 %v1027
      %1059 = vmatprep.subr.bf16.mxu0 0
      %1060 = vmatpush1.bf16.msra.mxu0 %v1028
      %1061 = vmatprep.subr.bf16.mxu0 0
      %1062 = vmatpush1.bf16.msra.mxu0 %v1029
      %1063 = vmatprep.subr.bf16.mxu0 0
      %1064 = vmatpush1.bf16.msra.mxu0 %v1030
      %1065 = vmatprep.subr.bf16.mxu0 0
      %1066 = vmatpush1.bf16.msra.mxu0 %v1031
      %1067 = vmatprep.subr.bf16.mxu0 0
      %1068 = vmatpush1.bf16.msra.mxu0 %v1032
      %1069 = vmatprep.subr.bf16.mxu0 0
      %1070 = vmatpush1.bf16.msra.mxu0 0
      %1071 = vmatprep.subr.bf16.mxu0 0
      %1072 = vmatpush1.bf16.msra.mxu0 0
      %1073 = vmatprep.subr.bf16.mxu0 0
      %1074 = vmatpush1.bf16.msra.mxu0 0
      %1075 = vmatprep.subr.bf16.mxu0 0
      %1076 = vmatpush1.bf16.msra.mxu0 0
      %1077 = vmatprep.subr.bf16.mxu0 0
      %1078 = vmatpush1.bf16.msra.mxu0 0
      %1079 = vmatprep.subr.bf16.mxu0 0
      %1080 = vmatpush1.bf16.msra.mxu0 0
      %1081 = vmatprep.subr.bf16.mxu0 0
      %1082 = vmatpush1.bf16.msra.mxu0 0
      %1083 = vmatprep.subr.bf16.mxu0 0
      %1084 = vmatpush1.bf16.msra.mxu0 0
      %1085 = vmatprep.mubr.bf16.mxu0 0
      %1086 = vmatmul.mubr.bf16.gmra.mrb[0].mxu0 %v1051
      %v1087 = vpop.f32.mrb[0].mxu0
      %v1088 = vadd.f32 %v1040, %v1087
      %v1089 = vpop.f32.mrb[0].mxu0
      %v1090 = vpop.f32.mrb[0].mxu0
      %v1091 = vadd.f32 %v1045, %v1090
      %v1092 = vpop.f32.mrb[0].mxu0
      %1093 = vdwg.mxu0
      %1094 = vst [vmem:[%s309] sm:$0xff] %v1088
      %1095 = vst [vmem:[%s309 + $0x8] sm:$0xf] %v1091
      %p1096 = scmp.lt.s32.totalorder %s22, 1
      %s1097 = scalar_select %p1096, %s22, 1
      %p1098 = scmp.lt.s32.totalorder %s23, 0
      %s1099 = scalar_select %p1098, %s23, 0
      %s1100 = smul.addr %s1097, 2
      %s1101 = sadd.s32 %s1099, %s1100
      %s1102 = smul.addr %s1101, 8
      %s1103 = scalar_lea.vmem %s7, %s1102
      // Predicated region
      $region49: #{_apply.1} parent=47 // pred_check
        %p1104 = pneg %p204
      $region50: #{_apply.1} parent=47 // pred_check_branch
        %1106 = sbr.rel (%p1104) target = $region52
      $region51: #{_apply.1} parent=47 // pred_region
        _
      $region52: #{_apply.1} parent=47 // pred_fallthru
        _
    $region48: #{_apply.1} parent=5 // pred_fallthru
      _
    %p1107 = scmp.le.s32.totalorder 2, %s13
    // Predicated region
    $region53: #{_apply.1} parent=5 // pred_check
      %p1108 = pneg %p1107
    $region54: #{_apply.1} parent=5 // pred_check_branch
      %1110 = sbr.rel (%p1108) target = $region56
    $region55: #{_apply.1} parent=5 // pred_region
      %s1111 = ssub.s32 %s13, 2
      // Predicated region
      $region57: #{_apply.1} parent=55 // pred_check
        %p1112 = pneg %p210
      $region58: #{_apply.1} parent=55 // pred_check_branch
        %1114 = sbr.rel (%p1112) target = $region60
      $region59: #{_apply.1} parent=55 // pred_region
        %p1115 = scmp.lt.s32.totalorder %s24, 1
        %s1116 = scalar_select %p1115, %s24, 1
        %p1117 = scmp.lt.s32.totalorder %s25, 0
        %s1118 = scalar_select %p1117, %s25, 0
        %s1119 = smul.addr %s1116, 2
        %s1120 = sadd.s32 %s1118, %s1119
        %s1121 = smul.addr %s1120, 8
        %s1122 = scalar_lea.vmem %s7, %s1121
      $region60: #{_apply.1} parent=55 // pred_fallthru
        _
    $region56: #{_apply.1} parent=5 // pred_fallthru
      _
  $region6: #{_apply.1} parent=0 // loop_footer
    %s17 = sadd.s32 1, %s13
  $region7: #{_apply.1} parent=0 // loop_footer_branch
    %12 = sbr.rel target = $region3
  $region8: #{_apply.1} parent=0 // loop_exit
    _

</llo_original>
